<compile_context>
chip_gen: v7x
topology: tpu7x:2x2x1
jax: 0.10.0
libtpu: 0.0.40
codegen_flags: <defaults>
</compile_context>

<pallas_src>
import functools

import jax
import jax.numpy as jnp
from jax import lax
from jax.experimental import pallas as pl
from jax.experimental.pallas import tpu as pltpu

_LANES = 128
_SUBLANES = 8


def _log_mse_kernel(p_ref, t_ref, o_ref, *, rows, block_rows, inner_steps, ragged):
    """One (block_rows, 128) tile: fold log(1 + (p - t)^2) into a (1, 128) partial."""
    c = pl.program_id(0)   # partial / TensorCore axis ("parallel")
    i = pl.program_id(1)   # reduction axis ("arbitrary"): output block stays resident

    @pl.when(i == 0)
    def _init():
        o_ref[...] = jnp.zeros_like(o_ref)

    def _load_diff():
        return p_ref[...].astype(jnp.float32) - t_ref[...].astype(jnp.float32)

    def _accum(d):
        # Masked positions carry d == 0 -> log(1 + 0) == 0 contribution.
        o_ref[0] += jnp.sum(jnp.log(1.0 + d * d), axis=0, keepdims=True)

    if not ragged:
        # Grid tiles the slab exactly: every block is full, no masking anywhere.
        _accum(_load_diff())
    else:
        b = c * inner_steps + i                      # logical (unclamped) block id
        block_is_full = (b + 1) * block_rows <= rows

        @pl.when(block_is_full)
        def _fast():                                  # unmasked fast path
            _accum(_load_diff())

        @pl.when(jnp.logical_not(block_is_full))
        def _boundary():                              # ragged / overhang block only
            row_id = b * block_rows + lax.broadcasted_iota(
                jnp.int32, (block_rows, _LANES), 0)
            _accum(jnp.where(row_id < rows, _load_diff(), 0.0))


def _tpu_kind():
    try:
        return jax.devices()[0].device_kind.lower()
    except Exception:
        return ""


def custom_log_mse_loss(pred, target, reduction="sum", *, block_rows=None,
                        num_partials=None):
    assert pred.shape == target.shape, "pred/target must have identical shapes"
    n = pred.size
    assert n > 0

    p_flat = jnp.ravel(pred)
    t_flat = jnp.ravel(target)

    # <128-element tail (numel not a multiple of 128) handled in plain JAX so the
    # kernel path never needs a wrapper-side jnp.pad copy of the inputs.
    n_main = (n // _LANES) * _LANES
    tail = jnp.float32(0.0)
    if n_main != n:
        dt = (p_flat[n_main:].astype(jnp.float32)
              - t_flat[n_main:].astype(jnp.float32))
        tail = jnp.sum(jnp.log(1.0 + dt * dt))

    if n_main == 0:
        total = tail
    else:
        rows = n_main // _LANES
        # TODO(synk): when numel % 128 != 0 the prefix slice below may materialize
        # a copy; the common aligned case is a pure (free) bitcast reshape.
        p2 = (p_flat if n_main == n else p_flat[:n_main]).reshape(rows, _LANES)
        t2 = (t_flat if n_main == n else t_flat[:n_main]).reshape(rows, _LANES)

        ip = jnp.dtype(pred.dtype).itemsize
        it = jnp.dtype(target.dtype).itemsize
        itemsize = max(ip, it)
        sub = max(_SUBLANES, 32 // ip, 32 // it)     # 8 f32 / 16 bf16 / 32 int8

        kind = _tpu_kind()
        is_v5e = ("v5 lite" in kind) or ("v5lite" in kind) or ("v5e" in kind)
        is_v7 = ("v7" in kind) or ("7x" in kind)

        if block_rows is None:
            # 4 MiB/input tile on v6e/v7x, 2 MiB on v5e; constant bytes/step for
            # narrower dtypes.
            base = 4096 if is_v5e else 8192
            block_rows = base * max(1, 4 // itemsize)
        if num_partials is None:
            num_partials = 2 if is_v7 else 1          # only v7x has 2 TensorCores

        # Tile sizing: clamp to the slab; keep a dtype-native sublane multiple
        # unless the block covers the whole array (full-dim blocks are exempt).
        block_rows = min(int(block_rows), rows)
        if block_rows < rows:
            block_rows = max(sub, block_rows - block_rows % sub)
            block_rows = min(block_rows, rows)
        blocks_total = pl.cdiv(rows, block_rows)

        num_partials = max(1, min(int(num_partials), blocks_total))
        inner_steps = pl.cdiv(blocks_total, num_partials)
        ragged = (rows % block_rows != 0) or (blocks_total % num_partials != 0)

        kernel = functools.partial(
            _log_mse_kernel, rows=rows, block_rows=block_rows,
            inner_steps=inner_steps, ragged=ragged)

        def in_map(c, i):
            # Clamp so an overhanging grid point never requests an OOB block; its
            # contribution is zeroed by the in-kernel boundary mask.
            return (jnp.minimum(c * inner_steps + i, blocks_total - 1), 0)

        # 2 pipeline buffers per input; leave headroom but never below 32 MiB.
        tile_bytes = block_rows * _LANES * (ip + it)
        vmem_limit = int(min(max(2 * tile_bytes + (4 << 20), 32 << 20), 96 << 20))

        partials = pl.pallas_call(
            kernel,
            out_shape=jax.ShapeDtypeStruct((num_partials, 1, _LANES), jnp.float32),
            grid_spec=pltpu.PrefetchScalarGridSpec(
                num_scalar_prefetch=0,
                grid=(num_partials, inner_steps),
                in_specs=[
                    pl.BlockSpec((block_rows, _LANES), in_map),
                    pl.BlockSpec((block_rows, _LANES), in_map),
                ],
                out_specs=pl.BlockSpec((1, 1, _LANES), lambda c, i: (c, 0, 0)),
            ),
            compiler_params=pltpu.CompilerParams(
                dimension_semantics=("parallel", "arbitrary"),
                vmem_limit_bytes=vmem_limit,
            ),
        )(p2, t2)
        total = jnp.sum(partials) + tail

    if reduction == "mean":
        return total / jnp.float32(n)
    return total


def _reference(pred, target, reduction="sum"):
    loss = jnp.log(1.0 + jnp.abs(pred - target) ** 2)
    return jnp.mean(loss) if reduction == "mean" else jnp.sum(loss)


if __name__ == "__main__":
    key = jax.random.PRNGKey(0)
    k1, k2, k3, k4, k5, k6 = jax.random.split(key, 6)

    # Primary test: small NCHW prediction map, auto (generation-aware) tiling.
    pred = jax.random.normal(k1, (2, 4, 16, 16), dtype=jnp.float32)
    target = jax.random.normal(k2, (2, 4, 16, 16), dtype=jnp.float32)

    out_sum = jax.block_until_ready(custom_log_mse_loss(pred, target, "sum"))
    out_mean = jax.block_until_ready(custom_log_mse_loss(pred, target, "mean"))
    ref_sum = _reference(pred, target, "sum")
    ref_mean = _reference(pred, target, "mean")
    assert jnp.allclose(out_sum, ref_sum, rtol=1e-5, atol=1e-4), (out_sum, ref_sum)
    assert jnp.allclose(out_mean, ref_mean, rtol=1e-5, atol=1e-4), (out_mean, ref_mean)

    # Coverage test: element count not a multiple of 128 (plain-JAX tail path),
    # ragged boundary block (in-kernel mask path), multi-step inner reduction
    # and a forced 2-way partial split.
    pred2 = jax.random.normal(k3, (2, 4, 61, 61), dtype=jnp.float32)
    target2 = jax.random.normal(k4, (2, 4, 61, 61), dtype=jnp.float32)
    out2 = jax.block_until_ready(
        custom_log_mse_loss(pred2, target2, "sum", block_rows=64, num_partials=2))
    ref2 = _reference(pred2, target2, "sum")
    assert jnp.allclose(out2, ref2, rtol=1e-5, atol=1e-3), (out2, ref2)

    # Dtype-coverage test: bf16 inputs stream natively and are cast in-register.
    pred3 = jax.random.normal(k5, (8, 256), dtype=jnp.bfloat16)
    target3 = jax.random.normal(k6, (8, 256), dtype=jnp.bfloat16)
    out3 = jax.block_until_ready(custom_log_mse_loss(pred3, target3, "sum"))
    ref3 = _reference(pred3.astype(jnp.float32), target3.astype(jnp.float32), "sum")
    assert jnp.allclose(out3, ref3, rtol=1e-5, atol=1e-3), (out3, ref3)

    print("KERNEL_OK")
</pallas_src>

<mosaic_0001>
module attributes {stable_mosaic.version = 11 : i64} {
  func.func @_log_mse_kernel(%arg0: i32, %arg1: i32, %arg2: memref<16x128xf32, #tpu.memory_space<vmem>>, %arg3: memref<16x128xf32, #tpu.memory_space<vmem>>, %arg4: memref<1x1x128xf32, #tpu.memory_space<vmem>>) attributes {dimension_semantics = [#tpu.dimension_semantics<parallel>, #tpu.dimension_semantics<arbitrary>], iteration_bounds = array<i64: 1, 1>, scalar_prefetch = 0 : i64, scratch_operands = 0 : i64, tpu.core_type = #tpu.core_type<tc>, window_params = [{transform_indices = @transform_0, window_bounds = array<i64: 16, 128>}, {transform_indices = @transform_1, window_bounds = array<i64: 16, 128>}, {transform_indices = @transform_2, window_bounds = array<i64: 1, 1, 128>}]} {
    %c0_i32 = arith.constant 0 : i32
    %0 = arith.cmpi eq, %arg1, %c0_i32 : i32
    %1 = arith.extui %0 : i1 to i32
    %c0_i32_0 = arith.constant 0 : i32
    %2 = arith.cmpi ne, %1, %c0_i32_0 : i32
    scf.if %2 {
      %cst_11 = arith.constant 0.000000e+00 : f32
      %18 = vector.broadcast %cst_11 : f32 to vector<1x1x128xf32>
      %c0_12 = arith.constant 0 : index
      %c0_13 = arith.constant 0 : index
      %c0_14 = arith.constant 0 : index
      %19 = vector.load %arg4[%c0_12, %c0_13, %c0_14] : memref<1x1x128xf32, #tpu.memory_space<vmem>>, vector<1x1x128xf32>
      tpu.vector_store %arg4[%c0_12, %c0_13, %c0_14], %18 {strides = array<i32>} : memref<1x1x128xf32, #tpu.memory_space<vmem>>, vector<1x1x128xf32>,
    } else {
    }
    %c0 = arith.constant 0 : index
    %c0_1 = arith.constant 0 : index
    %3 = vector.load %arg2[%c0, %c0_1] : memref<16x128xf32, #tpu.memory_space<vmem>>, vector<16x128xf32>
    %c0_2 = arith.constant 0 : index
    %c0_3 = arith.constant 0 : index
    %4 = vector.load %arg3[%c0_2, %c0_3] : memref<16x128xf32, #tpu.memory_space<vmem>>, vector<16x128xf32>
    %5 = arith.subf %3, %4 : vector<16x128xf32>
    %c0_4 = arith.constant 0 : index
    %c0_5 = arith.constant 0 : index
    %c0_6 = arith.constant 0 : index
    %6 = vector.load %arg4[%c0_4, %c0_5, %c0_6] : memref<1x1x128xf32, #tpu.memory_space<vmem>>, vector<1x1x128xf32>
    %7 = vector.shape_cast %6 : vector<1x1x128xf32> to vector<1x128xf32>
    %8 = arith.mulf %5, %5 : vector<16x128xf32>
    %cst = arith.constant 1.000000e+00 : f32
    %9 = vector.broadcast %cst : f32 to vector<16x128xf32>
    %10 = arith.addf %9, %8 : vector<16x128xf32>
    %11 = math.log %10 : vector<16x128xf32>
    %cst_7 = arith.constant dense<0.000000e+00> : vector<128xf32>
    %12 = vector.multi_reduction <add>, %11, %cst_7 [0] : vector<16x128xf32> to vector<128xf32>
    %13 = vector.shape_cast %12 : vector<128xf32> to vector<1x128xf32>
    %14 = arith.addf %7, %13 : vector<1x128xf32>
    %c0_8 = arith.constant 0 : index
    %c0_9 = arith.constant 0 : index
    %c0_10 = arith.constant 0 : index
    %15 = vector.load %arg4[%c0_8, %c0_9, %c0_10] : memref<1x1x128xf32, #tpu.memory_space<vmem>>, vector<1x1x128xf32>
    %16 = vector.shape_cast %15 : vector<1x1x128xf32> to vector<1x128xf32>
    %17 = vector.shape_cast %14 : vector<1x128xf32> to vector<1x1x128xf32>
    tpu.vector_store %arg4[%c0_8, %c0_9, %c0_10], %17 {strides = array<i32>} : memref<1x1x128xf32, #tpu.memory_space<vmem>>, vector<1x1x128xf32>,
    return
  }
  func.func @transform_0(%arg0: i32, %arg1: i32) -> (i32, i32) {
    %c1_i32 = arith.constant 1 : i32
    %0 = arith.muli %arg0, %c1_i32 : i32
    %1 = arith.addi %0, %arg1 : i32
    %c0_i32 = arith.constant 0 : i32
    %2 = arith.minsi %1, %c0_i32 : i32
    %c0_i32_0 = arith.constant 0 : i32
    %c0_i32_1 = arith.constant 0 : i32
    return %2, %c0_i32_0 : i32, i32
  }
  func.func @transform_1(%arg0: i32, %arg1: i32) -> (i32, i32) {
    %c1_i32 = arith.constant 1 : i32
    %0 = arith.muli %arg0, %c1_i32 : i32
    %1 = arith.addi %0, %arg1 : i32
    %c0_i32 = arith.constant 0 : i32
    %2 = arith.minsi %1, %c0_i32 : i32
    %c0_i32_0 = arith.constant 0 : i32
    %c0_i32_1 = arith.constant 0 : i32
    return %2, %c0_i32_0 : i32, i32
  }
  func.func @transform_2(%arg0: i32, %arg1: i32) -> (i32, i32, i32) {
    %c0_i32 = arith.constant 0 : i32
    %c0_i32_0 = arith.constant 0 : i32
    %c0_i32_1 = arith.constant 0 : i32
    return %arg0, %c0_i32, %c0_i32_0 : i32, i32, i32
  }
}

</mosaic_0001>

<llo_original>
// kernel: tpu_custom_call.1
$region0: #{tpu_custom_call.1}
  #allocation0 [shape = 'u32[]', space=smem, size = 0x4, offset = 0x4, fixed_abs, tag = 'smem constant byte address 0x4 - core index']
  #allocation1 [shape = 'u32[144,128]{1,0:T(1,128)}', space=vmem, size = 0x12000, scoped, tag = 'internal scratch']
  %s0 = inlined_call_operand.hbm [shape: f32[16,128], index: 0, kind: input, shape index: {}]
  %s1 = inlined_call_operand.hbm [shape: f32[16,128], index: 1, kind: input, shape index: {}]
  %s2 = inlined_call_operand.hbm [shape: f32[1,1,128], index: 2, kind: output, shape index: {}]
  %s3 = sld [smem:[#allocation0]]
  $region30: #{tpu_custom_call.1} parent=0
    _
  %s5 = ssub.s32 1, %s3
  %s6 = scalar_select 0, %s5, %s3
  $region1: #{tpu_custom_call.1} parent=0
    #allocation2 [shape = 'u8[8192]{0}', space=vmem, size = 0x2000, scoped, tag = 'input window, operand 0, single buffered']
    #allocation3 [shape = 's32[1]{0}', space=sflag, size = 0x4, scoped, tag = 'scoped memory for tpu_custom_call.1']
    #allocation4 [shape = 's32[1]{0}', space=sflag, size = 0x4, scoped, tag = 'scoped memory for tpu_custom_call.1']
    #allocation5 [shape = 'u8[8192]{0}', space=vmem, size = 0x2000, scoped, tag = 'input window, operand 1, single buffered']
    #allocation6 [shape = 's32[1]{0}', space=sflag, size = 0x4, scoped, tag = 'scoped memory for tpu_custom_call.1']
    #allocation7 [shape = 'u8[512]{0}', space=vmem, size = 0x400, scoped, tag = 'output window, operand 0, single buffered']
    %7 = vsyncpa [#allocation3], 0
    %8 = vsyncpa [#allocation6], 0
    %9 = vsyncpa [#allocation4], 0
    // Predicated region
    $region2: #{tpu_custom_call.1} parent=1 // pred_check
      _
    $region3: #{tpu_custom_call.1} parent=1 // pred_check_branch
      %11 = sbr.rel (0) target = $region5
    $region4: #{tpu_custom_call.1} parent=1 // pred_region
      %s12 = sadd.s32 0, 0
      %p13 = scmp.lt.s32.totalorder %s12, 0
      %s14 = scalar_select %p13, %s12, 0
      %s15 = smul.u32 2, %s14
      %s17 = ssub.s32 256, 256
      %18 = vsyncadd [#allocation3], %s17
      %s19 = smul.addr %s15, 128
      %s20 = scalar_lea.hbm %s0, %s19
      %s21 = sshll.u32 [#allocation2], 4
      %s22 = int_to_ptr.vmem [resolvable:$true] %s21
      %27 = dma.hbm_to_vmem [thread:$0]  %s20, 256, %s22, [#allocation3], 128, 128, 8
    $region5: #{tpu_custom_call.1} parent=1 // pred_fallthru
      _
    // Predicated region
    $region6: #{tpu_custom_call.1} parent=1 // pred_check
      _
    $region7: #{tpu_custom_call.1} parent=1 // pred_check_branch
      %29 = sbr.rel (0) target = $region9
    $region8: #{tpu_custom_call.1} parent=1 // pred_region
      %s30 = sadd.s32 0, 0
      %p31 = scmp.lt.s32.totalorder %s30, 0
      %s32 = scalar_select %p31, %s30, 0
      %s33 = smul.u32 2, %s32
      %s35 = ssub.s32 256, 256
      %36 = vsyncadd [#allocation6], %s35
      %s37 = smul.addr %s33, 128
      %s38 = scalar_lea.hbm %s1, %s37
      %s39 = sshll.u32 [#allocation5], 4
      %s40 = int_to_ptr.vmem [resolvable:$true] %s39
      %45 = dma.hbm_to_vmem [thread:$0]  %s38, 256, %s40, [#allocation6], 128, 128, 8
    $region9: #{tpu_custom_call.1} parent=1 // pred_fallthru
      _
    // Predicated region
    $region10: #{tpu_custom_call.1} parent=1 // pred_check
      _
    $region11: #{tpu_custom_call.1} parent=1 // pred_check_branch
      %47 = sbr.rel (0) target = $region13
    $region12: #{tpu_custom_call.1} parent=1 // pred_region
      %48 = dma.done [#allocation3], 256
    $region13: #{tpu_custom_call.1} parent=1 // pred_fallthru
      _
    // Predicated region
    $region14: #{tpu_custom_call.1} parent=1 // pred_check
      _
    $region15: #{tpu_custom_call.1} parent=1 // pred_check_branch
      %50 = sbr.rel (0) target = $region17
    $region16: #{tpu_custom_call.1} parent=1 // pred_region
      %51 = dma.done [#allocation6], 256
    $region17: #{tpu_custom_call.1} parent=1 // pred_fallthru
      _
    %s52 = sadd.s32 0, 0
    %p53 = scmp.lt.s32.totalorder %s52, 0
    %s54 = scalar_select %p53, %s52, 0
    %s55 = smul.u32 2, %s54
    %s56 = sadd.s32 0, 0
    %p57 = scmp.lt.s32.totalorder %s56, 0
    %s58 = scalar_select %p57, %s56, 0
    %s59 = smul.u32 2, %s58
    %p60 = scmp.eq.s32.totalorder 0, 0
    // Predicated region
    $region18: #{tpu_custom_call.1} parent=1 // pred_check
      %p61 = pneg %p60
    $region19: #{tpu_custom_call.1} parent=1 // pred_check_branch
      %63 = sbr.rel (%p61) target = $region21
    $region20: #{tpu_custom_call.1} parent=1 // pred_region
      %64 = vst [vmem:[#allocation7] sm:$0x1] 0.0
    $region21: #{tpu_custom_call.1} parent=1 // pred_fallthru
      _
    %v65 = vld [vmem:[#allocation2] sm:$0xff]
    %v66 = vld [vmem:[#allocation2 + $0x8] sm:$0xff]
    %v67 = vld [vmem:[#allocation5] sm:$0xff]
    %v68 = vld [vmem:[#allocation5 + $0x8] sm:$0xff]
    %v69 = vsub.f32 %v65, %v67
    %v70 = vsub.f32 %v66, %v68
    %v71 = vld [vmem:[#allocation7] sm:$0x1]
    %v72 = vmul.f32 %v69, %v69
    %v73 = vmul.f32 %v70, %v70
    %v74 = vadd.f32 %v72, 1.0
    %v75 = vadd.f32 %v73, 1.0
    %v76 = vlog2.pop %v74
    %v77 = vmul.f32 %v76, 0.6931472
    %v78 = vlog2.pop %v75
    %v79 = vmul.f32 %v78, 0.6931472
    %v80 = vadd.f32 %v77, %v79
    %v81 = vrot.slane %v80, 4
    %v82 = vadd.f32 %v80, %v81
    %v83 = vrot.slane %v82, 2
    %v84 = vadd.f32 %v82, %v83
    %v85 = vrot.slane %v84, 1
    %v86 = vadd.f32 %v84, %v85
    %v87 = vadd.f32 %v71, %v86
    %88 = vst [vmem:[#allocation7] sm:$0x1] %v87
    // Predicated region
    $region22: #{tpu_custom_call.1} parent=1 // pred_check
      _
    $region23: #{tpu_custom_call.1} parent=1 // pred_check_branch
      %90 = sbr.rel (0) target = $region25
    $region24: #{tpu_custom_call.1} parent=1 // pred_region
      %s92 = ssub.s32 16, 16
      %93 = vsyncadd [#allocation4], %s92
      %s95 = sshll.u32 [#allocation7], 4
      %s96 = int_to_ptr.vmem [resolvable:$true] %s95
      %98 = dma.vmem_to_hbm [thread:$0]  %s96, 16, %s2, [#allocation4]
    $region25: #{tpu_custom_call.1} parent=1 // pred_fallthru
      _
    // Predicated region
    $region26: #{tpu_custom_call.1} parent=1 // pred_check
      _
    $region27: #{tpu_custom_call.1} parent=1 // pred_check_branch
      %100 = sbr.rel (0) target = $region29
    $region28: #{tpu_custom_call.1} parent=1 // pred_region
      %101 = dma.done [#allocation4], 16
    $region29: #{tpu_custom_call.1} parent=1 // pred_fallthru
      _
    %102 = vsyncpa [#allocation3], 1
    %103 = vsyncpa [#allocation6], 1
    %104 = vsyncpa [#allocation4], 1

</llo_original>
